<compile_context>
chip_gen: v7x
topology: tpu7x:2x2x1
jax: 0.10.0
libtpu: 0.0.40
codegen_flags: <defaults>
</compile_context>

<pallas_src>
import functools

import jax
import jax.numpy as jnp
from jax.experimental import pallas as pl
from jax.experimental.pallas import tpu as pltpu


def _round_up(x: int, m: int) -> int:
    return ((x + m - 1) // m) * m


def _cdiv(a: int, b: int) -> int:
    return -(-a // b)


def _dice_bce_kernel(pred_ref, target_ref, inter_ref, denom_ref, bce_ref, *,
                     nc_total, hw_total, chunk_w, n_chunks,
                     need_row_mask, need_col_mask):
    """Accumulate lane-shaped (block_nc, chunk_w) partials for Dice & BCE."""
    block_nc, block_hw = pred_ref.shape

    @pl.when(pl.program_id(1) == 0)
    def _init():
        inter_ref[...] = jnp.zeros_like(inter_ref)
        denom_ref[...] = jnp.zeros_like(denom_ref)
        bce_ref[...] = jnp.zeros_like(bce_ref)

    row_ok = None
    if need_row_mask:
        row_ids = (jax.lax.broadcasted_iota(jnp.int32, (block_nc, chunk_w), 0)
                   + pl.program_id(0) * block_nc)
        row_ok = row_ids < nc_total
    col_base = pl.program_id(1) * block_hw

    def body(c, carry):
        inter, denom, bce = carry
        lo = pl.multiple_of(c * chunk_w, chunk_w)
        x = pred_ref[:, pl.ds(lo, chunk_w)].astype(jnp.float32)
        t = target_ref[:, pl.ds(lo, chunk_w)].astype(jnp.float32)

        mask = None
        if need_col_mask:
            col_ids = (jax.lax.broadcasted_iota(jnp.int32, (block_nc, chunk_w), 1)
                       + (col_base + c * chunk_w))
            mask = col_ids < hw_total
        if need_row_mask:
            mask = row_ok if mask is None else (mask & row_ok)
        if mask is not None:
            # pred -> -1e4 (sigmoid underflows to exactly 0), target -> 0:
            # masked elements contribute exactly zero to all three sums.
            x = jnp.where(mask, x, -1.0e4)
            t = jnp.where(mask, t, 0.0)

        s = jax.nn.sigmoid(x)
        inter = inter + s * t
        denom = denom + (s * s + t * t)
        # BCE-with-logits: max(x,0) - x*t + log1p(exp(-|x|))
        #               == max(x,0) - x*t - log(max(s, 1-s))   (reuses sigmoid)
        bce = bce + (jnp.maximum(x, 0.0) - x * t
                     - jnp.log(jnp.maximum(s, 1.0 - s)))
        return inter, denom, bce

    carry0 = (inter_ref[...], denom_ref[...], bce_ref[...])
    inter, denom, bce = jax.lax.fori_loop(0, n_chunks, body, carry0,
                                          unroll=min(2, n_chunks))
    inter_ref[...] = inter
    denom_ref[...] = denom
    bce_ref[...] = bce


def _hw_config():
    """Generation-aware VMEM budgets; a failed query falls back to the LARGE
    (v5e/v6e) config so v6e never silently gets the small-tile path."""
    vmem_cap = None
    try:
        vmem_cap = int(pltpu.get_tpu_info().vmem_capacity_bytes)
    except Exception:
        vmem_cap = None
    kind = ""
    try:
        kind = jax.devices()[0].device_kind.lower()
    except Exception:
        kind = ""
    is_v7 = (vmem_cap is not None and vmem_cap < 96 * 1024 * 1024) or ("v7" in kind)
    if is_v7:
        # 64 MiB per-TC VMEM: double-buffered inputs stay well under the limit.
        return {"vmem_limit": 44 * 1024 * 1024, "tile_budget": 5 * 1024 * 1024}
    return {"vmem_limit": 64 * 1024 * 1024, "tile_budget": 8 * 1024 * 1024}


def dice_bce_loss(pred: jax.Array, target: jax.Array, smooth: float = 1e-6,
                  *, binary_target: bool = False) -> jax.Array:
    """pred: (N, C, H, W) logits; target: (N, C, H, W), (N, H, W) or NHWC.

    Set binary_target=True for float 0/1 masks to stream them as bf16 (exact).
    """
    # Layout fixups exactly as in the PyTorch module (incl. its C==H fragility).
    if target.ndim == 3:
        target = target[:, None, :, :]
    if target.shape[1] != pred.shape[1]:
        # TODO(synk): NHWC targets could be reduced over (H, W) directly with a
        # layout-matched BlockSpec instead of this full HBM transpose.
        target = jnp.transpose(target, (0, 3, 1, 2))

    n, c, h, w = pred.shape
    nc, hw = n * c, h * w
    pred2 = pred.reshape(nc, hw)
    tgt2 = target.reshape(nc, hw)

    # bf16 targets when exactly representable (bool/int masks, or opt-in):
    # ~25% less HBM traffic for this memory-bound kernel.
    if (binary_target or tgt2.dtype == jnp.bool_
            or jnp.issubdtype(tgt2.dtype, jnp.integer)):
        tgt2 = tgt2.astype(jnp.bfloat16)

    cfg = _hw_config()
    row_align = 16 if tgt2.dtype == jnp.bfloat16 else 8

    # ---- row (parallel) tiling ----------------------------------------------
    # Small block_nc keeps the three f32 accumulators register-resident;
    # >= 2 row blocks whenever possible so both v7x TensorCores get work.
    cap_nc = 128
    if nc > cap_nc:
        block_nc = cap_nc
    elif nc >= 2 * row_align:
        block_nc = _round_up(_cdiv(nc, 2), row_align)
    else:
        block_nc = nc                      # single full-dim block (always legal)
    grid_nc = _cdiv(nc, block_nc)

    # ---- column (reduction) tiling ------------------------------------------
    item_sum = pred2.dtype.itemsize + tgt2.dtype.itemsize
    if hw >= 128:
        budget_cols = max(
            128, (cfg["tile_budget"] // (block_nc * item_sum)) // 128 * 128)
        block_hw = min(budget_cols, max(128, (hw // 128) * 128), 8192)
        chunk_w = 128
    else:
        block_hw = hw                      # full-dim block, single ragged chunk
        chunk_w = hw
    grid_hw = _cdiv(hw, block_hw)
    n_chunks = block_hw // chunk_w

    need_row_mask = grid_nc * block_nc != nc
    need_col_mask = grid_hw * block_hw != hw

    out_rows = grid_nc * block_nc
    part = jax.ShapeDtypeStruct((out_rows, chunk_w), jnp.float32)
    cost = pl.CostEstimate(
        flops=13 * nc * hw,
        transcendentals=2 * nc * hw,
        bytes_accessed=nc * hw * item_sum + 3 * out_rows * chunk_w * 4,
    )

    kernel = functools.partial(
        _dice_bce_kernel,
        nc_total=nc, hw_total=hw, chunk_w=chunk_w, n_chunks=n_chunks,
        need_row_mask=need_row_mask, need_col_mask=need_col_mask,
    )

    inter_l, denom_l, bce_l = pl.pallas_call(
        kernel,
        out_shape=(part, part, part),
        grid_spec=pltpu.PrefetchScalarGridSpec(
            num_scalar_prefetch=0,
            grid=(grid_nc, grid_hw),
            in_specs=[
                pl.BlockSpec((block_nc, block_hw), lambda i, j: (i, j)),
                pl.BlockSpec((block_nc, block_hw), lambda i, j: (i, j)),
            ],
            out_specs=(
                pl.BlockSpec((block_nc, chunk_w), lambda i, j: (i, 0)),
                pl.BlockSpec((block_nc, chunk_w), lambda i, j: (i, 0)),
                pl.BlockSpec((block_nc, chunk_w), lambda i, j: (i, 0)),
            ),
        ),
        compiler_params=pltpu.CompilerParams(
            dimension_semantics=("parallel", "arbitrary"),
            vmem_limit_bytes=cfg["vmem_limit"],
        ),
        cost_estimate=cost,
    )(pred2, tgt2)

    # ---- tiny finalize in plain JAX (single lane-reduce + means) ------------
    inter = jnp.sum(inter_l[:nc], axis=1)
    denom = jnp.sum(denom_l[:nc], axis=1)
    dice = (2.0 * inter + smooth) / (denom + smooth)
    dice_loss = 1.0 - jnp.mean(dice)
    bce_loss = jnp.sum(bce_l[:nc]) / float(nc * hw)
    return 0.5 * dice_loss + 0.5 * bce_loss


def _reference(pred, target, smooth=1e-6):
    # Plain-JAX reference mirroring the PyTorch module.
    if target.ndim == 3:
        target = target[:, None, :, :]
    if target.shape[1] != pred.shape[1]:
        target = jnp.transpose(target, (0, 3, 1, 2))
    pred = pred.astype(jnp.float32)
    target = target.astype(jnp.float32)
    s = jax.nn.sigmoid(pred)
    num = 2.0 * jnp.sum(s * target, axis=(2, 3)) + smooth
    den = jnp.sum(s * s + target * target, axis=(2, 3)) + smooth
    dice_loss = 1.0 - jnp.mean(num / den)
    bce = jnp.maximum(pred, 0.0) - pred * target + jnp.log1p(jnp.exp(-jnp.abs(pred)))
    return 0.5 * dice_loss + 0.5 * jnp.mean(bce)


if __name__ == "__main__":
    key = jax.random.PRNGKey(0)
    k1, k2, k3, k4, k5, k6 = jax.random.split(key, 6)

    # Test 1: aligned shapes, binary 0/1 mask streamed as bf16.
    N, C, H, W = 2, 4, 16, 16
    pred = jax.random.normal(k1, (N, C, H, W), dtype=jnp.float32)
    target = (jax.random.uniform(k2, (N, C, H, W)) > 0.5).astype(jnp.float32)
    loss = dice_bce_loss(pred, target, binary_target=True)
    jax.block_until_ready(loss)
    ref = _reference(pred, target)
    assert jnp.allclose(loss, ref, atol=1e-5, rtol=1e-5), (loss, ref)

    # Test 2: unaligned shapes + NHWC float target (in-kernel ragged-hw mask, no pad).
    N, C, H, W = 2, 3, 10, 17
    pred = jax.random.normal(k3, (N, C, H, W), dtype=jnp.float32)
    target_nhwc = jax.random.uniform(k4, (N, H, W, C), dtype=jnp.float32)
    loss = dice_bce_loss(pred, target_nhwc)
    jax.block_until_ready(loss)
    ref = _reference(pred, target_nhwc)
    assert jnp.allclose(loss, ref, atol=1e-5, rtol=1e-5), (loss, ref)

    # Test 3: bool target (auto bf16), 2x2 grid with ragged row AND column tails.
    N, C, H, W = 4, 9, 12, 20
    pred = jax.random.normal(k5, (N, C, H, W), dtype=jnp.float32)
    target_bool = jax.random.uniform(k6, (N, C, H, W)) > 0.5
    loss = dice_bce_loss(pred, target_bool)
    jax.block_until_ready(loss)
    ref = _reference(pred, target_bool)
    assert jnp.allclose(loss, ref, atol=1e-5, rtol=1e-5), (loss, ref)

    print("KERNEL_OK")
</pallas_src>

<mosaic_0001>
module attributes {stable_mosaic.version = 11 : i64} {
  func.func @_dice_bce_kernel(%arg0: i32, %arg1: i32, %arg2: memref<8x256xf32, #tpu.memory_space<vmem>>, %arg3: memref<8x256xbf16, #tpu.memory_space<vmem>>, %arg4: memref<8x128xf32, #tpu.memory_space<vmem>>, %arg5: memref<8x128xf32, #tpu.memory_space<vmem>>, %arg6: memref<8x128xf32, #tpu.memory_space<vmem>>) attributes {dimension_semantics = [#tpu.dimension_semantics<parallel>, #tpu.dimension_semantics<arbitrary>], iteration_bounds = array<i64: 1, 1>, scalar_prefetch = 0 : i64, scratch_operands = 0 : i64, tpu.core_type = #tpu.core_type<tc>, window_params = [{transform_indices = @transform_0, window_bounds = array<i64: 8, 256>}, {transform_indices = @transform_1, window_bounds = array<i64: 8, 256>}, {transform_indices = @transform_2, window_bounds = array<i64: 8, 128>}, {transform_indices = @transform_3, window_bounds = array<i64: 8, 128>}, {transform_indices = @transform_4, window_bounds = array<i64: 8, 128>}]} {
    %c0_i32 = arith.constant 0 : i32
    %0 = arith.cmpi eq, %arg1, %c0_i32 : i32
    %1 = arith.extui %0 : i1 to i32
    %c0_i32_0 = arith.constant 0 : i32
    %2 = arith.cmpi ne, %1, %c0_i32_0 : i32
    scf.if %2 {
      %cst_23 = arith.constant 0.000000e+00 : f32
      %65 = vector.broadcast %cst_23 : f32 to vector<8x128xf32>
      %c0_24 = arith.constant 0 : index
      %c0_25 = arith.constant 0 : index
      %66 = vector.load %arg4[%c0_24, %c0_25] : memref<8x128xf32, #tpu.memory_space<vmem>>, vector<8x128xf32>
      tpu.vector_store %arg4[%c0_24, %c0_25], %65 {strides = array<i32>} : memref<8x128xf32, #tpu.memory_space<vmem>>, vector<8x128xf32>,
      %cst_26 = arith.constant 0.000000e+00 : f32
      %67 = vector.broadcast %cst_26 : f32 to vector<8x128xf32>
      %c0_27 = arith.constant 0 : index
      %c0_28 = arith.constant 0 : index
      %68 = vector.load %arg5[%c0_27, %c0_28] : memref<8x128xf32, #tpu.memory_space<vmem>>, vector<8x128xf32>
      tpu.vector_store %arg5[%c0_27, %c0_28], %67 {strides = array<i32>} : memref<8x128xf32, #tpu.memory_space<vmem>>, vector<8x128xf32>,
      %cst_29 = arith.constant 0.000000e+00 : f32
      %69 = vector.broadcast %cst_29 : f32 to vector<8x128xf32>
      %c0_30 = arith.constant 0 : index
      %c0_31 = arith.constant 0 : index
      %70 = vector.load %arg6[%c0_30, %c0_31] : memref<8x128xf32, #tpu.memory_space<vmem>>, vector<8x128xf32>
      tpu.vector_store %arg6[%c0_30, %c0_31], %69 {strides = array<i32>} : memref<8x128xf32, #tpu.memory_space<vmem>>, vector<8x128xf32>,
    } else {
    }
    %c0 = arith.constant 0 : index
    %c0_1 = arith.constant 0 : index
    %3 = vector.load %arg4[%c0, %c0_1] : memref<8x128xf32, #tpu.memory_space<vmem>>, vector<8x128xf32>
    %c0_2 = arith.constant 0 : index
    %c0_3 = arith.constant 0 : index
    %4 = vector.load %arg5[%c0_2, %c0_3] : memref<8x128xf32, #tpu.memory_space<vmem>>, vector<8x128xf32>
    %c0_4 = arith.constant 0 : index
    %c0_5 = arith.constant 0 : index
    %5 = vector.load %arg6[%c0_4, %c0_5] : memref<8x128xf32, #tpu.memory_space<vmem>>, vector<8x128xf32>
    %c0_i32_6 = arith.constant 0 : i32
    %c128_i32 = arith.constant 128 : i32
    %6 = arith.muli %c0_i32_6, %c128_i32 : i32
    %7 = tpu.assume_multiple %6, 128 : i32
    %c0_7 = arith.constant 0 : index
    %8 = arith.index_cast %7 : i32 to index
    %9 = vector.load %arg2[%c0_7, %8] : memref<8x256xf32, #tpu.memory_space<vmem>>, vector<8x128xf32>
    %c0_8 = arith.constant 0 : index
    %10 = arith.index_cast %7 : i32 to index
    %11 = vector.load %arg3[%c0_8, %10] : memref<8x256xbf16, #tpu.memory_space<vmem>>, vector<8x128xbf16>
    %12 = arith.extf %11 : vector<8x128xbf16> to vector<8x128xf32>
    %13 = arith.negf %9 : vector<8x128xf32>
    %14 = math.exp %13 : vector<8x128xf32>
    %cst = arith.constant 1.000000e+00 : f32
    %15 = vector.broadcast %cst : f32 to vector<8x128xf32>
    %16 = arith.addf %15, %14 : vector<8x128xf32>
    %17 = arith.divf %15, %16 : vector<8x128xf32>
    %18 = arith.mulf %17, %12 : vector<8x128xf32>
    %19 = arith.addf %3, %18 : vector<8x128xf32>
    %20 = arith.mulf %17, %17 : vector<8x128xf32>
    %21 = arith.mulf %12, %12 : vector<8x128xf32>
    %22 = arith.addf %20, %21 : vector<8x128xf32>
    %23 = arith.addf %4, %22 : vector<8x128xf32>
    %cst_9 = arith.constant 0.000000e+00 : f32
    %24 = vector.broadcast %cst_9 : f32 to vector<8x128xf32>
    %25 = arith.maximumf %9, %24 : vector<8x128xf32>
    %26 = arith.mulf %9, %12 : vector<8x128xf32>
    %27 = arith.subf %25, %26 : vector<8x128xf32>
    %cst_10 = arith.constant 1.000000e+00 : f32
    %28 = vector.broadcast %cst_10 : f32 to vector<8x128xf32>
    %29 = arith.subf %28, %17 : vector<8x128xf32>
    %30 = arith.maximumf %17, %29 : vector<8x128xf32>
    %31 = math.log %30 : vector<8x128xf32>
    %32 = arith.subf %27, %31 : vector<8x128xf32>
    %33 = arith.addf %5, %32 : vector<8x128xf32>
    %c1_i32 = arith.constant 1 : i32
    %c128_i32_11 = arith.constant 128 : i32
    %34 = arith.muli %c1_i32, %c128_i32_11 : i32
    %35 = tpu.assume_multiple %34, 128 : i32
    %c0_12 = arith.constant 0 : index
    %36 = arith.index_cast %35 : i32 to index
    %37 = vector.load %arg2[%c0_12, %36] : memref<8x256xf32, #tpu.memory_space<vmem>>, vector<8x128xf32>
    %c0_13 = arith.constant 0 : index
    %38 = arith.index_cast %35 : i32 to index
    %39 = vector.load %arg3[%c0_13, %38] : memref<8x256xbf16, #tpu.memory_space<vmem>>, vector<8x128xbf16>
    %40 = arith.extf %39 : vector<8x128xbf16> to vector<8x128xf32>
    %41 = arith.negf %37 : vector<8x128xf32>
    %42 = math.exp %41 : vector<8x128xf32>
    %cst_14 = arith.constant 1.000000e+00 : f32
    %43 = vector.broadcast %cst_14 : f32 to vector<8x128xf32>
    %44 = arith.addf %43, %42 : vector<8x128xf32>
    %45 = arith.divf %43, %44 : vector<8x128xf32>
    %46 = arith.mulf %45, %40 : vector<8x128xf32>
    %47 = arith.addf %19, %46 : vector<8x128xf32>
    %48 = arith.mulf %45, %45 : vector<8x128xf32>
    %49 = arith.mulf %40, %40 : vector<8x128xf32>
    %50 = arith.addf %48, %49 : vector<8x128xf32>
    %51 = arith.addf %23, %50 : vector<8x128xf32>
    %cst_15 = arith.constant 0.000000e+00 : f32
    %52 = vector.broadcast %cst_15 : f32 to vector<8x128xf32>
    %53 = arith.maximumf %37, %52 : vector<8x128xf32>
    %54 = arith.mulf %37, %40 : vector<8x128xf32>
    %55 = arith.subf %53, %54 : vector<8x128xf32>
    %cst_16 = arith.constant 1.000000e+00 : f32
    %56 = vector.broadcast %cst_16 : f32 to vector<8x128xf32>
    %57 = arith.subf %56, %45 : vector<8x128xf32>
    %58 = arith.maximumf %45, %57 : vector<8x128xf32>
    %59 = math.log %58 : vector<8x128xf32>
    %60 = arith.subf %55, %59 : vector<8x128xf32>
    %61 = arith.addf %33, %60 : vector<8x128xf32>
    %c2_i32 = arith.constant 2 : i32
    %c0_17 = arith.constant 0 : index
    %c0_18 = arith.constant 0 : index
    %62 = vector.load %arg4[%c0_17, %c0_18] : memref<8x128xf32, #tpu.memory_space<vmem>>, vector<8x128xf32>
    tpu.vector_store %arg4[%c0_17, %c0_18], %47 {strides = array<i32>} : memref<8x128xf32, #tpu.memory_space<vmem>>, vector<8x128xf32>,
    %c0_19 = arith.constant 0 : index
    %c0_20 = arith.constant 0 : index
    %63 = vector.load %arg5[%c0_19, %c0_20] : memref<8x128xf32, #tpu.memory_space<vmem>>, vector<8x128xf32>
    tpu.vector_store %arg5[%c0_19, %c0_20], %51 {strides = array<i32>} : memref<8x128xf32, #tpu.memory_space<vmem>>, vector<8x128xf32>,
    %c0_21 = arith.constant 0 : index
    %c0_22 = arith.constant 0 : index
    %64 = vector.load %arg6[%c0_21, %c0_22] : memref<8x128xf32, #tpu.memory_space<vmem>>, vector<8x128xf32>
    tpu.vector_store %arg6[%c0_21, %c0_22], %61 {strides = array<i32>} : memref<8x128xf32, #tpu.memory_space<vmem>>, vector<8x128xf32>,
    return
  }
  func.func @transform_0(%arg0: i32, %arg1: i32) -> (i32, i32) {
    %c0_i32 = arith.constant 0 : i32
    return %arg0, %arg1 : i32, i32
  }
  func.func @transform_1(%arg0: i32, %arg1: i32) -> (i32, i32) {
    %c0_i32 = arith.constant 0 : i32
    return %arg0, %arg1 : i32, i32
  }
  func.func @transform_2(%arg0: i32, %arg1: i32) -> (i32, i32) {
    %c0_i32 = arith.constant 0 : i32
    %c0_i32_0 = arith.constant 0 : i32
    return %arg0, %c0_i32 : i32, i32
  }
  func.func @transform_3(%arg0: i32, %arg1: i32) -> (i32, i32) {
    %c0_i32 = arith.constant 0 : i32
    %c0_i32_0 = arith.constant 0 : i32
    return %arg0, %c0_i32 : i32, i32
  }
  func.func @transform_4(%arg0: i32, %arg1: i32) -> (i32, i32) {
    %c0_i32 = arith.constant 0 : i32
    %c0_i32_0 = arith.constant 0 : i32
    return %arg0, %c0_i32 : i32, i32
  }
}

</mosaic_0001>

<llo_original>
// kernel: tpu_custom_call.1
$region0: #{tpu_custom_call.1}
  #allocation0 [shape = 'u32[]', space=smem, size = 0x4, offset = 0x4, fixed_abs, tag = 'smem constant byte address 0x4 - core index']
  #allocation1 [shape = 'u32[144,128]{1,0:T(1,128)}', space=vmem, size = 0x12000, scoped, tag = 'internal scratch']
  %s0 = inlined_call_operand.hbm [shape: f32[8,256], index: 0, kind: input, shape index: {}]
  %s1 = inlined_call_operand.hbm [shape: bf16[8,256], index: 1, kind: input, shape index: {}]
  %s2 = inlined_call_operand.hbm [shape: f32[8,128], index: 2, kind: output, shape index: {0}]
  %s3 = inlined_call_operand.hbm [shape: f32[8,128], index: 3, kind: output, shape index: {1}]
  %s4 = inlined_call_operand.hbm [shape: f32[8,128], index: 4, kind: output, shape index: {2}]
  %5 = xla_tuple %s2, %s3, %s4
  %s6 = sld [smem:[#allocation0]]
  $region46: #{tpu_custom_call.1} parent=0
    _
  %s8 = ssub.s32 1, %s6
  %s9 = scalar_select 0, %s8, %s6
  $region1: #{tpu_custom_call.1} parent=0
    #allocation2 [shape = 'u8[8192]{0}', space=vmem, size = 0x2000, scoped, tag = 'input window, operand 0, single buffered']
    #allocation3 [shape = 's32[1]{0}', space=sflag, size = 0x4, scoped, tag = 'scoped memory for tpu_custom_call.1']
    #allocation4 [shape = 's32[1]{0}', space=sflag, size = 0x4, scoped, tag = 'scoped memory for tpu_custom_call.1']
    #allocation5 [shape = 'u8[4096]{0}', space=vmem, size = 0x1000, scoped, tag = 'input window, operand 1, single buffered']
    #allocation6 [shape = 's32[1]{0}', space=sflag, size = 0x4, scoped, tag = 'scoped memory for tpu_custom_call.1']
    #allocation7 [shape = 'u8[4096]{0}', space=vmem, size = 0x1000, scoped, tag = 'output window, operand 0, single buffered']
    #allocation8 [shape = 'u8[4096]{0}', space=vmem, size = 0x1000, scoped, tag = 'output window, operand 1, single buffered']
    #allocation9 [shape = 's32[1]{0}', space=sflag, size = 0x4, scoped, tag = 'scoped memory for tpu_custom_call.1']
    #allocation10 [shape = 'u8[4096]{0}', space=vmem, size = 0x1000, scoped, tag = 'output window, operand 2, single buffered']
    %10 = vsyncpa [#allocation3], 0
    %11 = vsyncpa [#allocation6], 0
    %12 = vsyncpa [#allocation4], 0
    %13 = vsyncpa [#allocation9], 0
    // Predicated region
    $region2: #{tpu_custom_call.1} parent=1 // pred_check
      _
    $region3: #{tpu_custom_call.1} parent=1 // pred_check_branch
      %15 = sbr.rel (0) target = $region5
    $region4: #{tpu_custom_call.1} parent=1 // pred_region
      %s17 = ssub.s32 256, 256
      %18 = vsyncadd [#allocation3], %s17
      %s20 = sshll.u32 [#allocation2], 4
      %s21 = int_to_ptr.vmem [resolvable:$true] %s20
      %23 = dma.hbm_to_vmem [thread:$0]  %s0, 256, %s21, [#allocation3]
    $region5: #{tpu_custom_call.1} parent=1 // pred_fallthru
      _
    // Predicated region
    $region6: #{tpu_custom_call.1} parent=1 // pred_check
      _
    $region7: #{tpu_custom_call.1} parent=1 // pred_check_branch
      %25 = sbr.rel (0) target = $region9
    $region8: #{tpu_custom_call.1} parent=1 // pred_region
      %s27 = ssub.s32 128, 128
      %28 = vsyncadd [#allocation6], %s27
      %s30 = sshll.u32 [#allocation5], 4
      %s31 = int_to_ptr.vmem [resolvable:$true] %s30
      %33 = dma.hbm_to_vmem [thread:$0]  %s1, 128, %s31, [#allocation6]
    $region9: #{tpu_custom_call.1} parent=1 // pred_fallthru
      _
    // Predicated region
    $region10: #{tpu_custom_call.1} parent=1 // pred_check
      _
    $region11: #{tpu_custom_call.1} parent=1 // pred_check_branch
      %35 = sbr.rel (0) target = $region13
    $region12: #{tpu_custom_call.1} parent=1 // pred_region
      %36 = dma.done [#allocation3], 256
    $region13: #{tpu_custom_call.1} parent=1 // pred_fallthru
      _
    // Predicated region
    $region14: #{tpu_custom_call.1} parent=1 // pred_check
      _
    $region15: #{tpu_custom_call.1} parent=1 // pred_check_branch
      %38 = sbr.rel (0) target = $region17
    $region16: #{tpu_custom_call.1} parent=1 // pred_region
      %39 = dma.done [#allocation6], 128
    $region17: #{tpu_custom_call.1} parent=1 // pred_fallthru
      _
    %p40 = scmp.eq.s32.totalorder 0, 0
    // Predicated region
    $region18: #{tpu_custom_call.1} parent=1 // pred_check
      %p41 = pneg %p40
    $region19: #{tpu_custom_call.1} parent=1 // pred_check_branch
      %43 = sbr.rel (%p41) target = $region21
    $region20: #{tpu_custom_call.1} parent=1 // pred_region
      %44 = vst [vmem:[#allocation7] sm:$0xff] 0.0
      %45 = vst [vmem:[#allocation8] sm:$0xff] 0.0
      %46 = vst [vmem:[#allocation10] sm:$0xff] 0.0
    $region21: #{tpu_custom_call.1} parent=1 // pred_fallthru
      _
    %v47 = vld [vmem:[#allocation7] sm:$0xff]
    %v48 = vld [vmem:[#allocation8] sm:$0xff]
    %v49 = vld [vmem:[#allocation10] sm:$0xff]
    %v50 = vld [vmem:[#allocation2] sm:$0xff]
    %v51 = vld [vmem:[#allocation5] sm:$0xf]
    %v52 = vunpack.c.l.bf16 %v51
    %v53 = vxor.u32 %v50, 2147483648
    %v54 = vmul.f32 %v53, 1.442695
    %v55 = vpow.pop %v54
    %v56 = vadd.f32 %v55, 1.0
    %v57 = vrcp.pop %v56
    %v58 = vmul.f32 1.0, %v57
    %v59 = vmul.f32 %v58, %v52
    %v60 = vadd.f32 %v47, %v59
    %v61 = vmul.f32 %v58, %v58
    %v62 = vmul.f32 %v52, %v52
    %v63 = vadd.f32 %v61, %v62
    %v64 = vadd.f32 %v48, %v63
    %v65 = vmax.f32 %v50, 0.0
    %v66 = vmul.f32 %v50, %v52
    %v67 = vsub.f32 %v65, %v66
    %v68 = vsub.f32 1.0, %v58
    %v69 = vmax.f32 %v58, %v68
    %v70 = vlog2.pop %v69
    %v71 = vmul.f32 %v70, 0.6931472
    %v72 = vsub.f32 %v67, %v71
    %v73 = vadd.f32 %v49, %v72
    %s74 = scalar_lea.vmem [#allocation2], 8
    %v75 = vld [vmem:[%s74] sm:$0xff]
    %s76 = scalar_lea.vmem [#allocation5], 4
    %v77 = vld [vmem:[%s76] sm:$0xf]
    %v78 = vunpack.c.l.bf16 %v77
    %v79 = vxor.u32 %v75, 2147483648
    %v80 = vmul.f32 %v79, 1.442695
    %v81 = vpow.pop %v80
    %v82 = vadd.f32 %v81, 1.0
    %v83 = vrcp.pop %v82
    %v84 = vmul.f32 1.0, %v83
    %v85 = vmul.f32 %v84, %v78
    %v86 = vadd.f32 %v60, %v85
    %v87 = vmul.f32 %v84, %v84
    %v88 = vmul.f32 %v78, %v78
    %v89 = vadd.f32 %v87, %v88
    %v90 = vadd.f32 %v64, %v89
    %v91 = vmax.f32 %v75, 0.0
    %v92 = vmul.f32 %v75, %v78
    %v93 = vsub.f32 %v91, %v92
    %v94 = vsub.f32 1.0, %v84
    %v95 = vmax.f32 %v84, %v94
    %v96 = vlog2.pop %v95
    %v97 = vmul.f32 %v96, 0.6931472
    %v98 = vsub.f32 %v93, %v97
    %v99 = vadd.f32 %v73, %v98
    %100 = vst [vmem:[#allocation7] sm:$0xff] %v86
    %101 = vst [vmem:[#allocation8] sm:$0xff] %v90
    %102 = vst [vmem:[#allocation10] sm:$0xff] %v99
    // Predicated region
    $region22: #{tpu_custom_call.1} parent=1 // pred_check
      _
    $region23: #{tpu_custom_call.1} parent=1 // pred_check_branch
      %104 = sbr.rel (0) target = $region25
    $region24: #{tpu_custom_call.1} parent=1 // pred_region
      %s106 = ssub.s32 128, 128
      %107 = vsyncadd [#allocation4], %s106
      %s109 = sshll.u32 [#allocation7], 4
      %s110 = int_to_ptr.vmem [resolvable:$true] %s109
      %112 = dma.vmem_to_hbm [thread:$0]  %s110, 128, %s2, [#allocation4]
    $region25: #{tpu_custom_call.1} parent=1 // pred_fallthru
      _
    // Predicated region
    $region26: #{tpu_custom_call.1} parent=1 // pred_check
      _
    $region27: #{tpu_custom_call.1} parent=1 // pred_check_branch
      %114 = sbr.rel (0) target = $region29
    $region28: #{tpu_custom_call.1} parent=1 // pred_region
      %s116 = ssub.s32 128, 128
      %117 = vsyncadd [#allocation9], %s116
      %s119 = sshll.u32 [#allocation8], 4
      %s120 = int_to_ptr.vmem [resolvable:$true] %s119
      %122 = dma.vmem_to_hbm [thread:$0]  %s120, 128, %s3, [#allocation9]
    $region29: #{tpu_custom_call.1} parent=1 // pred_fallthru
      _
    // Predicated region
    $region30: #{tpu_custom_call.1} parent=1 // pred_check
      _
    $region31: #{tpu_custom_call.1} parent=1 // pred_check_branch
      %124 = sbr.rel (0) target = $region33
    $region32: #{tpu_custom_call.1} parent=1 // pred_region
      %s126 = ssub.s32 128, 128
      %127 = vsyncadd [#allocation9], %s126
      %s129 = sshll.u32 [#allocation10], 4
      %s130 = int_to_ptr.vmem [resolvable:$true] %s129
      %132 = dma.vmem_to_hbm [thread:$0]  %s130, 128, %s4, [#allocation9]
    $region33: #{tpu_custom_call.1} parent=1 // pred_fallthru
      _
    // Predicated region
    $region34: #{tpu_custom_call.1} parent=1 // pred_check
      _
    $region35: #{tpu_custom_call.1} parent=1 // pred_check_branch
      %134 = sbr.rel (0) target = $region37
    $region36: #{tpu_custom_call.1} parent=1 // pred_region
      %135 = dma.done [#allocation4], 128
    $region37: #{tpu_custom_call.1} parent=1 // pred_fallthru
      _
    // Predicated region
    $region38: #{tpu_custom_call.1} parent=1 // pred_check
      _
    $region39: #{tpu_custom_call.1} parent=1 // pred_check_branch
      %137 = sbr.rel (0) target = $region41
    $region40: #{tpu_custom_call.1} parent=1 // pred_region
      %138 = dma.done [#allocation9], 128
    $region41: #{tpu_custom_call.1} parent=1 // pred_fallthru
      _
    // Predicated region
    $region42: #{tpu_custom_call.1} parent=1 // pred_check
      _
    $region43: #{tpu_custom_call.1} parent=1 // pred_check_branch
      %140 = sbr.rel (0) target = $region45
    $region44: #{tpu_custom_call.1} parent=1 // pred_region
      %141 = dma.done [#allocation9], 128
    $region45: #{tpu_custom_call.1} parent=1 // pred_fallthru
      _
    %142 = vsyncpa [#allocation3], 1
    %143 = vsyncpa [#allocation6], 1
    %144 = vsyncpa [#allocation4], 1
    %145 = vsyncpa [#allocation9], 1

</llo_original>
